<compile_context>
chip_gen: v6e
topology: v6e:2x2x1
jax: 0.10.0
libtpu: 0.0.40
codegen_flags: <defaults>
</compile_context>

<pallas_src>
import math

import jax
import jax.numpy as jnp
from jax.experimental import pallas as pl
from jax.experimental.pallas import tpu as pltpu


_SQRT_2_OVER_PI = math.sqrt(2.0 / math.pi)

# Assume the smallest-VMEM part (v7x, 64 MiB) if hardware introspection fails.
_FALLBACK_VMEM_CAPACITY = 64 * 1024 * 1024


def _gelu_kernel(x_ref, o_ref):
    x = x_ref[...]
    # f32 math: required on v5e (no bf16 VPU/EUP) and free here (mem-bound).
    xf = x.astype(jnp.float32)
    inner = _SQRT_2_OVER_PI * (xf + 0.044715 * (xf * xf * xf))
    y = 0.5 * xf * (1.0 + jnp.tanh(inner))
    o_ref[...] = y.astype(o_ref.dtype)


def _vmem_capacity_bytes():
    try:
        return int(pltpu.get_tpu_info().vmem_capacity_bytes)
    except Exception:
        return _FALLBACK_VMEM_CAPACITY


def _generation_budgets():
    """(tile_bytes, vmem_limit_bytes, force_multi_tile) gated on physical VMEM.

    One code path stays correct/near-optimal on 64 MiB (v7x) vs 128 MiB
    (v5e/v6e) parts; prevents a tile size that fits v6e from OOMing v7x.
    """
    cap = _vmem_capacity_bytes()
    if cap <= 64 * 1024 * 1024:
        # v7x: 3.2 TB/s HBM, 2 TensorCores, 64 MiB VMEM.
        # 8 MiB tiles -> 4 buffers x 8 MiB = 32 MiB in flight, 40 MiB scoped limit.
        # Also force >=2 grid steps so "parallel" can shard across both TCs.
        return 8 * 1024 * 1024, 40 * 1024 * 1024, True
    # v5e / v6e: single TC, 128 MiB physical VMEM.  8 MiB tiles keep per-step
    # overhead negligible; explicit limit gives headroom over v5e's 16 MiB
    # default scoped VMEM.
    return 8 * 1024 * 1024, 64 * 1024 * 1024, False


def _pick_layout(shape):
    """Pick a lane-dense 2D (rows, lanes) layout for the flattened tensor."""
    total = math.prod(shape) if shape else 1
    last = shape[-1] if shape else 1
    if last % 128 == 0:
        # Last dim already lane-dense: only collapse leading dims.  This is a
        # layout-preserving (no-copy) reshape for default layouts and the most
        # benign one for non-default layouts.
        return total // last, last
    # Otherwise try a full flatten onto a large multiple-of-128 lane dim
    # (unmasked, lane-dense stores).
    for lanes in (2048, 1024, 512, 256, 128):
        if total % lanes == 0:
            return total // lanes, lanes
    # Fallback: keep the original last dim on lanes (block == full dim is legal).
    return total // last, last


def _round_up(x, m):
    return ((x + m - 1) // m) * m


def gelu_pallas(x, *, donate_input=False, max_tile_bytes=None):
    """tanh-GELU, elementwise; same shape/dtype as input.

    donate_input: set True only if the caller no longer needs x (aliases the
    input buffer for the output; lowers peak HBM, traffic is unchanged).
    max_tile_bytes: optional cap on the per-tile byte budget (testing knob).
    """
    orig_shape = x.shape
    rows, lanes = _pick_layout(orig_shape)
    x2d = x.reshape(rows, lanes)

    itemsize = jnp.dtype(x.dtype).itemsize
    bytes_per_row = lanes * itemsize
    total_bytes = rows * bytes_per_row

    tile_bytes, vmem_limit, force_multi_tile = _generation_budgets()
    if max_tile_bytes is not None:
        tile_bytes = min(tile_bytes, max_tile_bytes)

    # Native sublane tile for this dtype: f32 -> 8, bf16 -> 16, int8/fp8 -> 32.
    sublane = max(8, 32 // itemsize)

    if rows <= sublane:
        row_tile = rows                          # block == full dim -> always legal
    else:
        max_rows = max(1, tile_bytes // bytes_per_row)
        row_tile = min(rows, max_rows)
        row_tile = max(sublane, (row_tile // sublane) * sublane)
        if force_multi_tile and total_bytes > 2 * 1024 * 1024:
            # v7x: guarantee >=2 grid steps so both TensorCores get a share.
            half = _round_up(pl.cdiv(rows, 2), sublane)
            row_tile = max(sublane, min(row_tile, half))

    # Ragged last tile is fine: Pallas masks out-of-bounds stores and the
    # padding values fed through tanh are harmless (do NOT "fix" by dropping cdiv).
    grid = (pl.cdiv(rows, row_tile),)

    numel = rows * lanes
    cost = pl.CostEstimate(
        flops=8 * numel,
        transcendentals=numel,
        bytes_accessed=2 * numel * itemsize,
    )

    out = pl.pallas_call(
        _gelu_kernel,
        out_shape=jax.ShapeDtypeStruct((rows, lanes), x.dtype),
        grid_spec=pltpu.PrefetchScalarGridSpec(
            num_scalar_prefetch=0,
            grid=grid,
            # Default Buffered(2) already saturates the DMA engine for a pure
            # stream; deeper buffering only inflates VMEM (matters on v7x).
            in_specs=[pl.BlockSpec((row_tile, lanes), lambda i: (i, 0))],
            out_specs=pl.BlockSpec((row_tile, lanes), lambda i: (i, 0)),
        ),
        compiler_params=pltpu.CompilerParams(
            dimension_semantics=("parallel",),   # sharded across v7x's 2 TCs
            vmem_limit_bytes=vmem_limit,
        ),
        cost_estimate=cost,
        input_output_aliases={0: 0} if donate_input else {},
    )(x2d)
    return out.reshape(orig_shape)


def gelu_ref(x):
    xf = x.astype(jnp.float32)
    y = 0.5 * xf * (1.0 + jnp.tanh(_SQRT_2_OVER_PI * (xf + 0.044715 * xf**3)))
    return y.astype(x.dtype)


if __name__ == "__main__":
    key = jax.random.PRNGKey(0)
    k1, k2, k3, k4 = jax.random.split(key, 4)

    # 1) Small (batch, seq, hidden) with a non-lane-dense last dim (full flatten path).
    x_small = jax.random.normal(k1, (2, 8, 32), dtype=jnp.float32)
    out_small = jax.block_until_ready(gelu_pallas(x_small))
    assert out_small.shape == x_small.shape and out_small.dtype == x_small.dtype
    assert jnp.allclose(out_small, gelu_ref(x_small), atol=1e-5, rtol=1e-5)

    # 2) GPT-125M hidden size (768, lane-dense last dim -> leading-dim collapse only).
    x_gpt = jax.random.normal(k2, (2, 16, 768), dtype=jnp.float32)
    out_gpt = jax.block_until_ready(gelu_pallas(x_gpt))
    assert out_gpt.shape == x_gpt.shape and out_gpt.dtype == x_gpt.dtype
    assert jnp.allclose(out_gpt, gelu_ref(x_gpt), atol=1e-5, rtol=1e-5)

    # 2b) Same tensor via the donated-input path (aliased output buffer).
    x_don = x_gpt + 0.0
    out_don = jax.block_until_ready(gelu_pallas(x_don, donate_input=True))
    assert jnp.allclose(out_don, gelu_ref(x_gpt), atol=1e-5, rtol=1e-5)

    # 3) bf16 path (sublane tile = 16).
    x_bf16 = jax.random.normal(k3, (4, 64, 768), dtype=jnp.bfloat16)
    out_bf16 = jax.block_until_ready(gelu_pallas(x_bf16))
    assert out_bf16.shape == x_bf16.shape and out_bf16.dtype == x_bf16.dtype
    assert jnp.allclose(out_bf16.astype(jnp.float32),
                        gelu_ref(x_bf16).astype(jnp.float32),
                        atol=2e-2, rtol=2e-2)

    # 4) Multi-step grid + ragged last tile (small tensor, tile budget capped).
    x_rag = jax.random.normal(k4, (13, 4, 768), dtype=jnp.float32)  # 52 rows
    out_rag = jax.block_until_ready(gelu_pallas(x_rag, max_tile_bytes=32 * 1024))
    assert out_rag.shape == x_rag.shape and out_rag.dtype == x_rag.dtype
    assert jnp.allclose(out_rag, gelu_ref(x_rag), atol=1e-5, rtol=1e-5)

    print("KERNEL_OK")
</pallas_src>

<mosaic_0001>
module attributes {stable_mosaic.version = 11 : i64} {
  func.func @_gelu_kernel(%arg0: i32, %arg1: memref<1x512xf32, #tpu.memory_space<vmem>>, %arg2: memref<1x512xf32, #tpu.memory_space<vmem>>) attributes {dimension_semantics = [#tpu.dimension_semantics<parallel>], iteration_bounds = array<i64: 1>, scalar_prefetch = 0 : i64, scratch_operands = 0 : i64, tpu.core_type = #tpu.core_type<tc>, window_params = [{transform_indices = @transform_0, window_bounds = array<i64: 1, 512>}, {transform_indices = @transform_1, window_bounds = array<i64: 1, 512>}]} {
    %c0 = arith.constant 0 : index
    %c0_0 = arith.constant 0 : index
    %0 = vector.load %arg1[%c0, %c0_0] : memref<1x512xf32, #tpu.memory_space<vmem>>, vector<1x512xf32>
    %1 = arith.mulf %0, %0 : vector<1x512xf32>
    %2 = arith.mulf %1, %0 : vector<1x512xf32>
    %cst = arith.constant 4.471500e-02 : f32
    %3 = vector.broadcast %cst : f32 to vector<1x512xf32>
    %4 = arith.mulf %3, %2 : vector<1x512xf32>
    %5 = arith.addf %0, %4 : vector<1x512xf32>
    %cst_1 = arith.constant 0.797884583 : f32
    %6 = vector.broadcast %cst_1 : f32 to vector<1x512xf32>
    %7 = arith.mulf %6, %5 : vector<1x512xf32>
    %cst_2 = arith.constant 5.000000e-01 : f32
    %8 = vector.broadcast %cst_2 : f32 to vector<1x512xf32>
    %9 = arith.mulf %8, %0 : vector<1x512xf32>
    %10 = math.tanh %7 : vector<1x512xf32>
    %cst_3 = arith.constant 1.000000e+00 : f32
    %11 = vector.broadcast %cst_3 : f32 to vector<1x512xf32>
    %12 = arith.addf %11, %10 : vector<1x512xf32>
    %13 = arith.mulf %9, %12 : vector<1x512xf32>
    %c0_4 = arith.constant 0 : index
    %c0_5 = arith.constant 0 : index
    %14 = vector.load %arg2[%c0_4, %c0_5] : memref<1x512xf32, #tpu.memory_space<vmem>>, vector<1x512xf32>
    tpu.vector_store %arg2[%c0_4, %c0_5], %13 {strides = array<i32>} : memref<1x512xf32, #tpu.memory_space<vmem>>, vector<1x512xf32>,
    return
  }
  func.func @transform_0(%arg0: i32) -> (i32, i32) {
    %c0_i32 = arith.constant 0 : i32
    %c0_i32_0 = arith.constant 0 : i32
    return %arg0, %c0_i32 : i32, i32
  }
  func.func @transform_1(%arg0: i32) -> (i32, i32) {
    %c0_i32 = arith.constant 0 : i32
    %c0_i32_0 = arith.constant 0 : i32
    return %arg0, %c0_i32 : i32, i32
  }
}

</mosaic_0001>

<llo_original>
// kernel: tpu_custom_call.1
$region0: #{tpu_custom_call.1}
  #allocation0 [shape = 'u32[]', space=smem, size = 0x4, offset = 0x4, fixed_abs, tag = 'smem constant byte address 0x4 - core index']
  #allocation1 [shape = 'u32[144,128]{1,0:T(1,128)}', space=vmem, size = 0x12000, scoped, tag = 'internal scratch']
  %s0 = inlined_call_operand.hbm [shape: f32[1,512], index: 0, kind: input, shape index: {}]
  %s1 = inlined_call_operand.hbm [shape: f32[1,512], index: 1, kind: output, shape index: {}]
  %s2 = sld [smem:[#allocation0]]
  $region18: #{tpu_custom_call.1} parent=0
    _
  %s4 = ssub.s32 1, %s2
  %s5 = scalar_select 0, %s4, %s2
  $region1: #{tpu_custom_call.1} parent=0
    #allocation2 [shape = 'u8[2048]{0}', space=vmem, size = 0x800, scoped, tag = 'input window, operand 0, single buffered']
    #allocation3 [shape = 's32[1]{0}', space=sflag, size = 0x4, scoped, tag = 'scoped memory for tpu_custom_call.1']
    #allocation4 [shape = 's32[1]{0}', space=sflag, size = 0x4, scoped, tag = 'scoped memory for tpu_custom_call.1']
    #allocation5 [shape = 'u8[2048]{0}', space=vmem, size = 0x800, scoped, tag = 'output window, operand 0, single buffered']
    %6 = vsyncpa [#allocation3], 0
    %7 = vsyncpa [#allocation4], 0
    // Predicated region
    $region2: #{tpu_custom_call.1} parent=1 // pred_check
      _
    $region3: #{tpu_custom_call.1} parent=1 // pred_check_branch
      %9 = sbr.rel (0) target = $region5
    $region4: #{tpu_custom_call.1} parent=1 // pred_region
      %s11 = ssub.s32 64, 64
      %12 = vsyncadd [#allocation3], %s11
      %s14 = sshll.u32 [#allocation2], 4
      %s15 = int_to_ptr.vmem [resolvable:$true] %s14
      %17 = dma.hbm_to_vmem [thread:$0]  %s0, 64, %s15, [#allocation3]
    $region5: #{tpu_custom_call.1} parent=1 // pred_fallthru
      _
    // Predicated region
    $region6: #{tpu_custom_call.1} parent=1 // pred_check
      _
    $region7: #{tpu_custom_call.1} parent=1 // pred_check_branch
      %19 = sbr.rel (0) target = $region9
    $region8: #{tpu_custom_call.1} parent=1 // pred_region
      %20 = dma.done [#allocation3], 64
    $region9: #{tpu_custom_call.1} parent=1 // pred_fallthru
      _
    %v21 = vld [vmem:[#allocation2] sm:$0xf]
    %v22 = vmul.f32 %v21, %v21
    %v23 = vmul.f32 %v22, %v21
    %v24 = vmul.f32 %v23, 0.044715
    %v25 = vadd.f32 %v21, %v24
    %v26 = vmul.f32 %v25, 0.7978846
    %v27 = vmul.f32 %v21, 0.5
    %v28 = vtanh.pop %v26
    %v29 = vadd.f32 %v28, 1.0
    %v30 = vmul.f32 %v27, %v29
    %v31 = vlaneseq
    %vm32 = vcmp.ge.s32.totalorder %v31, 0
    %vm33 = vcmp.lt.s32.totalorder %v31, 512
    %vm34 = vmand %vm32, %vm33
    %35 = vst.msk [vmem:[#allocation5] sm:$0xf] %vm34, %v30
    // Predicated region
    $region10: #{tpu_custom_call.1} parent=1 // pred_check
      _
    $region11: #{tpu_custom_call.1} parent=1 // pred_check_branch
      %37 = sbr.rel (0) target = $region13
    $region12: #{tpu_custom_call.1} parent=1 // pred_region
      %s39 = ssub.s32 64, 64
      %40 = vsyncadd [#allocation4], %s39
      %s42 = sshll.u32 [#allocation5], 4
      %s43 = int_to_ptr.vmem [resolvable:$true] %s42
      %45 = dma.vmem_to_hbm [thread:$0]  %s43, 64, %s1, [#allocation4]
    $region13: #{tpu_custom_call.1} parent=1 // pred_fallthru
      _
    // Predicated region
    $region14: #{tpu_custom_call.1} parent=1 // pred_check
      _
    $region15: #{tpu_custom_call.1} parent=1 // pred_check_branch
      %47 = sbr.rel (0) target = $region17
    $region16: #{tpu_custom_call.1} parent=1 // pred_region
      %48 = dma.done [#allocation4], 64
    $region17: #{tpu_custom_call.1} parent=1 // pred_fallthru
      _
    %49 = vsyncpa [#allocation3], 1
    %50 = vsyncpa [#allocation4], 1

</llo_original>
